<compile_context>
chip_gen: v7x
topology: tpu7x:2x2x1
jax: 0.10.0
libtpu: 0.0.40
codegen_flags: <defaults>
</compile_context>

<pallas_src>
import jax
import jax.numpy as jnp
from jax import lax
from jax.experimental import pallas as pl
from jax.experimental.pallas import tpu as pltpu

EPS = 1e-5  # nn.LayerNorm default


def _residual_kernel(x_ref, gamma_ref, beta_ref, w_ref, b_ref, o_ref, y_ref):
    """Computes one (TM, TN) output tile.

    x_ref:      (TM, D)  input rows (full hidden width, needed for LN stats)
    gamma/beta: (1,  D)  LayerNorm affine params (f32)
    w_ref:      (D, TN)  sublayer Linear weight column tile (bf16)
    b_ref:      (1, TN)  sublayer Linear bias column tile (f32)
    o_ref:      (TM, TN) output tile = x[:, cols] + Linear(LN(x))[:, cols]
    y_ref:      (TM, D)  bf16 scratch: LayerNorm output cached per row tile
    """
    tn = o_ref.shape[-1]
    j = pl.program_id(1)

    # LayerNorm once per row tile (column axis is the inner grid axis).
    @pl.when(j == 0)
    def _():
        xf = x_ref[...].astype(jnp.float32)
        mean = jnp.mean(xf, axis=-1, keepdims=True)
        cent = xf - mean
        var = jnp.mean(cent * cent, axis=-1, keepdims=True)  # biased, as torch
        xn = cent * lax.rsqrt(var + EPS)
        # bf16 MXU operand; stats stayed in f32.
        y_ref[...] = (xn * gamma_ref[...] + beta_ref[...]).astype(y_ref.dtype)

    # Sublayer Linear(D, D); this instance computes columns [j*TN, (j+1)*TN).
    z = jnp.dot(y_ref[...], w_ref[...], preferred_element_type=jnp.float32) + b_ref[...]

    # Dropout in eval mode == identity.
    # TODO(synk): training-mode dropout would use pltpu.prng_seed / prng_random_bits.

    # Residual add with the matching column slice of x.
    col0 = pl.multiple_of(j * tn, 128)
    x_res = x_ref[:, pl.ds(col0, tn)].astype(jnp.float32)
    o_ref[...] = (x_res + z).astype(o_ref.dtype)


def _round_up(n, m):
    return (n + m - 1) // m * m


def _cdiv(a, b):
    return -(-a // b)


def _maybe_single_buffered(shape, index_map, single_buffer):
    """BlockSpec helper: single-buffer blocks whose index never changes."""
    if single_buffer and hasattr(pl, "Buffered"):
        try:
            return pl.BlockSpec(shape, index_map, pipeline_mode=pl.Buffered(1))
        except TypeError:  # older jax without pipeline_mode kwarg
            pass
    return pl.BlockSpec(shape, index_map)


def _vmem_capacity_bytes():
    try:
        return int(pltpu.get_tpu_info().vmem_capacity_bytes)
    except Exception:
        return 64 * 1024 * 1024  # conservative (fits every generation)


def residual_connection(x, gamma, beta, w, b, *, tile_rows=None, tile_cols=None):
    """x: [B, S, D]. Returns x + Linear(LayerNorm(x)) (dropout = eval-mode identity)."""
    B, S, D = x.shape
    assert D % 128 == 0, "hidden size must be a multiple of 128 (lane width)"
    rows = B * S

    vmem_cap = _vmem_capacity_bytes()
    small_vmem = vmem_cap <= 96 * 1024 * 1024  # v7x-class: 64 MiB per TensorCore

    # Column tile over W's output dim. Keeping W fully resident (tn == D) means
    # it is DMA'd from HBM exactly once; otherwise it is re-streamed per row tile.
    if tile_cols is None:
        w_resident_limit = 2048 if small_vmem else 4096
        tile_cols = D if D <= w_resident_limit else 512
    tn = D if D <= tile_cols else tile_cols
    assert D % tn == 0 and tn % 128 == 0, "tile_cols must divide D and be a multiple of 128"
    w_resident = tn == D

    # Row tile: big on 128 MiB parts (amortizes any W re-streaming: FLOPs/W-byte = tm),
    # moderate on 64 MiB parts (near the roofline knee already; VMEM is the scarce resource).
    if tile_rows is None:
        tile_rows = 256 if small_vmem else 512
    tm = _round_up(min(tile_rows, _round_up(rows, 8)), 8)

    # v7x: nudge the row-tile count to an even number so both TensorCores get work.
    if small_vmem and tm >= 16:
        if _cdiv(rows, tm) % 2 == 1:
            tm_half = _round_up(_cdiv(tm, 2), 8)
            if _cdiv(rows, tm_half) % 2 == 0:
                tm = tm_half

    padded_rows = _round_up(rows, tm)

    x2 = x.reshape(rows, D)
    if padded_rows != rows:
        # Padded rows flow through LN/matmul harmlessly (no NaNs) and are sliced off.
        x2 = jnp.pad(x2, ((0, padded_rows - rows), (0, 0)))

    gamma2 = gamma.reshape(1, D).astype(jnp.float32)
    beta2 = beta.reshape(1, D).astype(jnp.float32)
    b2 = b.reshape(1, D).astype(jnp.float32)
    w_bf = w.astype(jnp.bfloat16)  # halves W's DMA/VMEM footprint; f32 accumulate

    # VMEM budget: pipelined tiles + LN cache scratch + f32 LN temporaries,
    # clamped against the queried physical capacity (leaves headroom for Mosaic
    # internal scratch).
    x_itemsize = x2.dtype.itemsize
    w_buffers = 1 if w_resident else 2
    needed = (
        2 * tm * D * x_itemsize        # x row tiles (double-buffered)
        + 2 * tm * tn * x_itemsize     # output tiles (double-buffered)
        + w_buffers * D * tn * 2       # bf16 W tile(s)
        + 2 * D * 4                    # gamma / beta (single-buffered)
        + w_buffers * tn * 4           # bias tile(s)
        + tm * D * 2                   # bf16 LN cache scratch
        + 4 * tm * D * 4               # f32 LN temporaries (xf / cent / xn / ...)
    )
    vmem_limit = max(int(1.25 * needed), 32 * 1024 * 1024)
    vmem_limit = int(min(vmem_limit, vmem_cap - 4 * 1024 * 1024))

    in_specs = [
        # x rows: full hidden width needed for LN stats + residual slice.
        pl.BlockSpec((tm, D), lambda i, j: (i, 0)),
        # gamma / beta: block index never changes -> single buffer.
        _maybe_single_buffered((1, D), lambda i, j: (0, 0), True),
        _maybe_single_buffered((1, D), lambda i, j: (0, 0), True),
        # W column tile (bf16): single buffer when fully resident (constant index).
        _maybe_single_buffered((D, tn), lambda i, j: (0, j), w_resident),
        # bias column tile: same residency condition as W.
        _maybe_single_buffered((1, tn), lambda i, j: (0, j), w_resident),
    ]

    out2 = pl.pallas_call(
        _residual_kernel,
        out_shape=jax.ShapeDtypeStruct((padded_rows, D), x.dtype),
        grid_spec=pltpu.PrefetchScalarGridSpec(
            num_scalar_prefetch=0,
            # Rows leading ("parallel", megacore-shardable); columns inner
            # ("arbitrary") so the LN cache written at j == 0 is always fresh.
            grid=(padded_rows // tm, D // tn),
            in_specs=in_specs,
            out_specs=pl.BlockSpec((tm, tn), lambda i, j: (i, j)),
            scratch_shapes=[pltpu.VMEM((tm, D), jnp.bfloat16)],  # cached LN output
        ),
        compiler_params=pltpu.CompilerParams(
            dimension_semantics=("parallel", "arbitrary"),
            vmem_limit_bytes=vmem_limit,
        ),
        # NOTE: no input_output_aliases — x is not donated by the caller, so an
        # alias would only force XLA to insert a defensive copy of x.
    )(x2, gamma2, beta2, w_bf, b2)

    return out2[:rows].reshape(B, S, D)


def _reference(x, gamma, beta, w, b):
    xf = x.astype(jnp.float32)
    mean = jnp.mean(xf, axis=-1, keepdims=True)
    var = jnp.mean((xf - mean) ** 2, axis=-1, keepdims=True)
    xn = (xf - mean) * lax.rsqrt(var + EPS)
    y = xn * gamma.astype(jnp.float32) + beta.astype(jnp.float32)
    z = y @ w.astype(jnp.float32) + b.astype(jnp.float32)
    return xf + z


def _make_inputs(key, B, S, D, dtype=jnp.float32):
    kx, kg, kb, kw, kbias = jax.random.split(key, 5)
    x = jax.random.normal(kx, (B, S, D), dtype=jnp.float32).astype(dtype)
    gamma = jnp.ones((D,), jnp.float32) + 0.01 * jax.random.normal(kg, (D,))
    beta = 0.01 * jax.random.normal(kb, (D,))
    w = jax.random.normal(kw, (D, D), dtype=jnp.float32) / jnp.sqrt(D)
    b = 0.01 * jax.random.normal(kbias, (D,))
    return x, gamma, beta, w, b


if __name__ == "__main__":
    key = jax.random.PRNGKey(0)
    k1, k2, k3 = jax.random.split(key, 3)

    fn = jax.jit(residual_connection, static_argnames=("tile_rows", "tile_cols"))

    # Case 1: small canonical shape (single row tile, W fully resident).
    x, gamma, beta, w, b = _make_inputs(k1, 2, 8, 128)
    out = jax.block_until_ready(fn(x, gamma, beta, w, b))
    ref = _reference(x, gamma, beta, w, b)
    assert out.shape == x.shape and out.dtype == x.dtype
    # bf16 matmul operands -> tolerance relaxed vs a pure-f32 path.
    assert jnp.allclose(out.astype(jnp.float32), ref, atol=5e-2, rtol=5e-2), "case 1 mismatch"

    # Case 2: ragged row count (padding) + multiple row tiles + 2 column tiles
    # (exercises the cached-LN reuse across column tiles and W re-streaming path).
    x, gamma, beta, w, b = _make_inputs(k2, 2, 101, 256)
    out = jax.block_until_ready(fn(x, gamma, beta, w, b, tile_rows=64, tile_cols=128))
    ref = _reference(x, gamma, beta, w, b)
    assert out.shape == x.shape and out.dtype == x.dtype
    assert jnp.allclose(out.astype(jnp.float32), ref, atol=5e-2, rtol=5e-2), "case 2 mismatch"

    # Case 3: bf16 activations end-to-end (no forced f32 round-trip in the wrapper).
    x, gamma, beta, w, b = _make_inputs(k3, 2, 16, 128, dtype=jnp.bfloat16)
    out = jax.block_until_ready(fn(x, gamma, beta, w, b))
    ref = _reference(x, gamma, beta, w, b)
    assert out.shape == x.shape and out.dtype == jnp.bfloat16
    assert jnp.allclose(out.astype(jnp.float32), ref, atol=1e-1, rtol=1e-1), "case 3 mismatch"

    print("KERNEL_OK")
</pallas_src>

<mosaic_0001>
module attributes {stable_mosaic.version = 11 : i64} {
  func.func @_residual_kernel(%arg0: i32, %arg1: i32, %arg2: memref<8x128xf32, #tpu.memory_space<vmem>>, %arg3: memref<1x128xf32, #tpu.memory_space<vmem>>, %arg4: memref<1x128xf32, #tpu.memory_space<vmem>>, %arg5: memref<128x128xbf16, #tpu.memory_space<vmem>>, %arg6: memref<1x128xf32, #tpu.memory_space<vmem>>, %arg7: memref<8x128xf32, #tpu.memory_space<vmem>>, %arg8: memref<8x128xbf16, #tpu.memory_space<vmem>>) attributes {dimension_semantics = [#tpu.dimension_semantics<parallel>, #tpu.dimension_semantics<arbitrary>], iteration_bounds = array<i64: 2, 1>, scalar_prefetch = 0 : i64, scratch_operands = 1 : i64, tpu.core_type = #tpu.core_type<tc>, window_params = [{transform_indices = @transform_0, window_bounds = array<i64: 8, 128>}, {pipeline_mode = #tpu.pipeline_mode<synchronous>, transform_indices = @transform_1, window_bounds = array<i64: 1, 128>}, {pipeline_mode = #tpu.pipeline_mode<synchronous>, transform_indices = @transform_2, window_bounds = array<i64: 1, 128>}, {pipeline_mode = #tpu.pipeline_mode<synchronous>, transform_indices = @transform_3, window_bounds = array<i64: 128, 128>}, {pipeline_mode = #tpu.pipeline_mode<synchronous>, transform_indices = @transform_4, window_bounds = array<i64: 1, 128>}, {transform_indices = @transform_5, window_bounds = array<i64: 8, 128>}]} {
    %c0_i32 = arith.constant 0 : i32
    %0 = arith.cmpi eq, %arg1, %c0_i32 : i32
    %1 = arith.extui %0 : i1 to i32
    %c0_i32_0 = arith.constant 0 : i32
    %2 = arith.cmpi ne, %1, %c0_i32_0 : i32
    scf.if %2 {
      %c0_9 = arith.constant 0 : index
      %c0_10 = arith.constant 0 : index
      %15 = vector.load %arg2[%c0_9, %c0_10] : memref<8x128xf32, #tpu.memory_space<vmem>>, vector<8x128xf32>
      %cst_11 = arith.constant dense<0.000000e+00> : vector<8xf32>
      %16 = vector.multi_reduction <add>, %15, %cst_11 [1] : vector<8x128xf32> to vector<8xf32>
      %17 = vector.shape_cast %16 : vector<8xf32> to vector<8x1xf32>
      %cst_12 = arith.constant 1.280000e+02 : f32
      %18 = vector.broadcast %cst_12 : f32 to vector<8x1xf32>
      %19 = arith.divf %17, %18 : vector<8x1xf32>
      %20 = vector.broadcast %19 : vector<8x1xf32> to vector<8x128xf32>
      %21 = arith.subf %15, %20 : vector<8x128xf32>
      %22 = arith.mulf %21, %21 : vector<8x128xf32>
      %cst_13 = arith.constant dense<0.000000e+00> : vector<8xf32>
      %23 = vector.multi_reduction <add>, %22, %cst_13 [1] : vector<8x128xf32> to vector<8xf32>
      %24 = vector.shape_cast %23 : vector<8xf32> to vector<8x1xf32>
      %cst_14 = arith.constant 1.280000e+02 : f32
      %25 = vector.broadcast %cst_14 : f32 to vector<8x1xf32>
      %26 = arith.divf %24, %25 : vector<8x1xf32>
      %cst_15 = arith.constant 9.99999974E-6 : f32
      %27 = vector.broadcast %cst_15 : f32 to vector<8x1xf32>
      %28 = arith.addf %26, %27 : vector<8x1xf32>
      %29 = math.rsqrt %28 : vector<8x1xf32>
      %30 = vector.broadcast %29 : vector<8x1xf32> to vector<8x128xf32>
      %31 = arith.mulf %21, %30 : vector<8x128xf32>
      %c0_16 = arith.constant 0 : index
      %c0_17 = arith.constant 0 : index
      %32 = vector.load %arg3[%c0_16, %c0_17] : memref<1x128xf32, #tpu.memory_space<vmem>>, vector<1x128xf32>
      %33 = vector.broadcast %32 : vector<1x128xf32> to vector<8x128xf32>
      %34 = arith.mulf %31, %33 : vector<8x128xf32>
      %c0_18 = arith.constant 0 : index
      %c0_19 = arith.constant 0 : index
      %35 = vector.load %arg4[%c0_18, %c0_19] : memref<1x128xf32, #tpu.memory_space<vmem>>, vector<1x128xf32>
      %36 = vector.broadcast %35 : vector<1x128xf32> to vector<8x128xf32>
      %37 = arith.addf %34, %36 : vector<8x128xf32>
      %38 = arith.truncf %37 : vector<8x128xf32> to vector<8x128xbf16>
      %c0_20 = arith.constant 0 : index
      %c0_21 = arith.constant 0 : index
      %39 = vector.load %arg8[%c0_20, %c0_21] : memref<8x128xbf16, #tpu.memory_space<vmem>>, vector<8x128xbf16>
      tpu.vector_store %arg8[%c0_20, %c0_21], %38 {strides = array<i32>} : memref<8x128xbf16, #tpu.memory_space<vmem>>, vector<8x128xbf16>,
    } else {
    }
    %c0 = arith.constant 0 : index
    %c0_1 = arith.constant 0 : index
    %3 = vector.load %arg8[%c0, %c0_1] : memref<8x128xbf16, #tpu.memory_space<vmem>>, vector<8x128xbf16>
    %c0_2 = arith.constant 0 : index
    %c0_3 = arith.constant 0 : index
    %4 = vector.load %arg5[%c0_2, %c0_3] : memref<128x128xbf16, #tpu.memory_space<vmem>>, vector<128x128xbf16>
    %cst = arith.constant dense<0.000000e+00> : vector<8x128xf32>
    %5 = tpu.matmul %3, %4, %cst {dimension_numbers = #tpu.dot_dimension_numbers<[1], [0], [0], [1], [0, 0, 1, 1], [], []>} : vector<8x128xbf16>, vector<128x128xbf16>, vector<8x128xf32> -> vector<8x128xf32>
    %c0_4 = arith.constant 0 : index
    %c0_5 = arith.constant 0 : index
    %6 = vector.load %arg6[%c0_4, %c0_5] : memref<1x128xf32, #tpu.memory_space<vmem>>, vector<1x128xf32>
    %7 = vector.broadcast %6 : vector<1x128xf32> to vector<8x128xf32>
    %8 = arith.addf %5, %7 : vector<8x128xf32>
    %c128_i32 = arith.constant 128 : i32
    %9 = arith.muli %arg1, %c128_i32 : i32
    %10 = tpu.assume_multiple %9, 128 : i32
    %c0_6 = arith.constant 0 : index
    %11 = arith.index_cast %10 : i32 to index
    %12 = vector.load %arg2[%c0_6, %11] : memref<8x128xf32, #tpu.memory_space<vmem>>, vector<8x128xf32>
    %13 = arith.addf %12, %8 : vector<8x128xf32>
    %c0_7 = arith.constant 0 : index
    %c0_8 = arith.constant 0 : index
    %14 = vector.load %arg7[%c0_7, %c0_8] : memref<8x128xf32, #tpu.memory_space<vmem>>, vector<8x128xf32>
    tpu.vector_store %arg7[%c0_7, %c0_8], %13 {strides = array<i32>} : memref<8x128xf32, #tpu.memory_space<vmem>>, vector<8x128xf32>,
    return
  }
  func.func @transform_0(%arg0: i32, %arg1: i32) -> (i32, i32) {
    %c0_i32 = arith.constant 0 : i32
    %c0_i32_0 = arith.constant 0 : i32
    return %arg0, %c0_i32 : i32, i32
  }
  func.func @transform_1(%arg0: i32, %arg1: i32) -> (i32, i32) {
    %c0_i32 = arith.constant 0 : i32
    %c0_i32_0 = arith.constant 0 : i32
    %c0_i32_1 = arith.constant 0 : i32
    return %c0_i32, %c0_i32_0 : i32, i32
  }
  func.func @transform_2(%arg0: i32, %arg1: i32) -> (i32, i32) {
    %c0_i32 = arith.constant 0 : i32
    %c0_i32_0 = arith.constant 0 : i32
    %c0_i32_1 = arith.constant 0 : i32
    return %c0_i32, %c0_i32_0 : i32, i32
  }
  func.func @transform_3(%arg0: i32, %arg1: i32) -> (i32, i32) {
    %c0_i32 = arith.constant 0 : i32
    %c0_i32_0 = arith.constant 0 : i32
    return %c0_i32, %arg1 : i32, i32
  }
  func.func @transform_4(%arg0: i32, %arg1: i32) -> (i32, i32) {
    %c0_i32 = arith.constant 0 : i32
    %c0_i32_0 = arith.constant 0 : i32
    return %c0_i32, %arg1 : i32, i32
  }
  func.func @transform_5(%arg0: i32, %arg1: i32) -> (i32, i32) {
    %c0_i32 = arith.constant 0 : i32
    return %arg0, %arg1 : i32, i32
  }
}

</mosaic_0001>

<llo_original>
// kernel: residual_connection.1
$region0: #{residual_connection.1}
  #allocation0 [shape = 'u32[]', space=smem, size = 0x4, offset = 0x4, fixed_abs, tag = 'smem constant byte address 0x4 - core index']
  #allocation1 [shape = 'u32[144,128]{1,0:T(1,128)}', space=vmem, size = 0x12000, scoped, tag = 'internal scratch']
  #allocation2 [shape = 'bf16[8,128]{1,0:T(8,128)(2,1)}', space=vmem, size = 0x800, scoped, tag = 'scratch operand']
  %s0 = inlined_call_operand.vmem [shape: f32[16,128], index: 0, kind: input, shape index: {}]
  %s1 = inlined_call_operand.vmem [shape: f32[1,128], index: 1, kind: input, shape index: {}]
  %s2 = inlined_call_operand.vmem [shape: f32[1,128], index: 2, kind: input, shape index: {}]
  %s3 = inlined_call_operand.vmem [shape: bf16[128,128], index: 3, kind: input, shape index: {}]
  %s4 = inlined_call_operand.vmem [shape: f32[1,128], index: 4, kind: input, shape index: {}]
  %s5 = inlined_call_operand.hbm [shape: f32[16,128], index: 5, kind: output, shape index: {}]
  %s6 = sld [smem:[#allocation0]]
  $region57: #{residual_connection.1} parent=0
    _
  %s8 = ssub.s32 1, %s6
  %s9 = scalar_select 0, %s8, %s6
  $region1: #{residual_connection.1} parent=0
    #allocation3 [shape = 'u8[8192]{0}', space=vmem, size = 0x2000, scoped, tag = 'output window, operand 0']
    #allocation4 [shape = 's32[2]{0}', space=sflag, size = 0x8, scoped, tag = 'scoped memory for residual_connection.1']
    %10 = vsyncpa [#allocation4], 0
    %s11 = scalar_lea.sflag [#allocation4], 1
    %12 = vsyncpa %s11, 0
    loop: start=0, step=1, limit=4
    $region2: #{residual_connection.1} parent=1 // loop_pre_header
      _
    $region3: #{residual_connection.1} parent=1 // loop_header
      %s14 = sphi 0, %s18
      %p15 = scmp.ge.s32.totalorder %s14, 4
      %s21 = sphi 0, %s33
      %s22 = sphi 0, %s29
      %s23 = sphi 0, %s21
      %s24 = sphi 0, %s22
      %s25 = sphi 0, %s23
      %s26 = sphi 0, %s24
      %s36 = sphi 0, %s38
      %s39 = sphi 0, %s36
      %s40 = sphi 0, %s39
      %s56 = sphi 0, %s40
      %s60 = sphi 0, %s60
      %s62 = sphi 0, %s60
      %s63 = sphi 0, %s62
      %s77 = sphi 0, %s63
      %s81 = sphi 0, %s81
      %s83 = sphi 0, %s81
      %s84 = sphi 0, %s83
      %s98 = sphi 0, %s84
      %s104 = sphi 0, %s106
      %s107 = sphi 0, %s104
      %s108 = sphi 0, %s107
      %s124 = sphi 0, %s108
      %s130 = sphi 0, %s132
      %s133 = sphi 0, %s130
      %s134 = sphi 0, %s133
      %s150 = sphi 0, %s134
      %s158 = sphi 0, %s160
      %s161 = sphi 0, %s158
      %s162 = sphi 0, %s161
      %s178 = sphi 0, %s162
    $region4: #{residual_connection.1} parent=1 // loop_header_branch
      %17 = sbr.rel (%p15) target = $region8
    $region5: #{residual_connection.1} parent=1 // loop_body
      %s19 = ssub.s32 %s14, 1
      %s20 = ssub.s32 %s14, 2
      %s27 = sadd.s32 1, %s22
      %p28 = scmp.ge.s32.totalorder %s27, 1
      %s29 = scalar_select %p28, 0, %s27
      %s30 = sadd.s32 1, %s21
      %s31 = scalar_select %p28, %s30, %s21
      %p32 = scmp.ge.s32.totalorder %s31, 2
      %s33 = scalar_select %p32, 0, %s31
      %s34 = ssub.s32 %s21, %s33
      %p35 = scmp.eq.s32.totalorder %s34, 0
      %s37 = sadd.s32 %s36, 1
      %s38 = scalar_select %p35, %s36, %s37
      %p41 = pneg %p35
      %p42 = scmp.eq.s32.totalorder %s14, 1
      %p43 = por %p41, %p42
      %p44 = scmp.ne.s32.totalorder %s36, %s39
      %p45 = scmp.eq.s32.totalorder %s14, 0
      %p46 = por %p44, %p45
      %p47 = scmp.ne.s32.totalorder %s36, %s39
      %p48 = scmp.eq.s32.totalorder %s19, 1
      %p49 = por %p47, %p48
      %p50 = scmp.ne.s32.totalorder %s39, %s40
      %p51 = scmp.eq.s32.totalorder %s19, 0
      %p52 = por %p50, %p51
      %p53 = scmp.ne.s32.totalorder %s39, %s40
      %p54 = scmp.eq.s32.totalorder %s20, 1
      %p55 = por %p53, %p54
      %p57 = scmp.ne.s32.totalorder %s40, %s56
      %p58 = scmp.eq.s32.totalorder %s20, 0
      %p59 = por %p57, %p58
      %s61 = sadd.s32 %s60, 1
      %p64 = scmp.eq.s32.totalorder %s14, 1
      %p65 = scmp.ne.s32.totalorder %s60, %s62
      %p66 = scmp.eq.s32.totalorder %s14, 0
      %p67 = por %p65, %p66
      %p68 = scmp.ne.s32.totalorder %s60, %s62
      %p69 = scmp.eq.s32.totalorder %s19, 1
      %p70 = por %p68, %p69
      %p71 = scmp.ne.s32.totalorder %s62, %s63
      %p72 = scmp.eq.s32.totalorder %s19, 0
      %p73 = por %p71, %p72
      %p74 = scmp.ne.s32.totalorder %s62, %s63
      %p75 = scmp.eq.s32.totalorder %s20, 1
      %p76 = por %p74, %p75
      %p78 = scmp.ne.s32.totalorder %s63, %s77
      %p79 = scmp.eq.s32.totalorder %s20, 0
      %p80 = por %p78, %p79
      %s82 = sadd.s32 %s81, 1
      %p85 = scmp.eq.s32.totalorder %s14, 1
      %p86 = scmp.ne.s32.totalorder %s81, %s83
      %p87 = scmp.eq.s32.totalorder %s14, 0
      %p88 = por %p86, %p87
      %p89 = scmp.ne.s32.totalorder %s81, %s83
      %p90 = scmp.eq.s32.totalorder %s19, 1
      %p91 = por %p89, %p90
      %p92 = scmp.ne.s32.totalorder %s83, %s84
      %p93 = scmp.eq.s32.totalorder %s19, 0
      %p94 = por %p92, %p93
      %p95 = scmp.ne.s32.totalorder %s83, %s84
      %p96 = scmp.eq.s32.totalorder %s20, 1
      %p97 = por %p95, %p96
      %p99 = scmp.ne.s32.totalorder %s84, %s98
      %p100 = scmp.eq.s32.totalorder %s20, 0
      %p101 = por %p99, %p100
      %s102 = ssub.s32 %s22, %s29
      %p103 = scmp.eq.s32.totalorder %s102, 0
      %s105 = sadd.s32 %s104, 1
      %s106 = scalar_select %p103, %s104, %s105
      %p109 = pneg %p103
      %p110 = scmp.eq.s32.totalorder %s14, 1
      %p111 = por %p109, %p110
      %p112 = scmp.ne.s32.totalorder %s104, %s107
      %p113 = scmp.eq.s32.totalorder %s14, 0
      %p114 = por %p112, %p113
      %p115 = scmp.ne.s32.totalorder %s104, %s107
      %p116 = scmp.eq.s32.totalorder %s19, 1
      %p117 = por %p115, %p116
      %p118 = scmp.ne.s32.totalorder %s107, %s108
      %p119 = scmp.eq.s32.totalorder %s19, 0
      %p120 = por %p118, %p119
      %p121 = scmp.ne.s32.totalorder %s107, %s108
      %p122 = scmp.eq.s32.totalorder %s20, 1
      %p123 = por %p121, %p122
      %p125 = scmp.ne.s32.totalorder %s108, %s124
      %p126 = scmp.eq.s32.totalorder %s20, 0
      %p127 = por %p125, %p126
      %s128 = ssub.s32 %s22, %s29
      %p129 = scmp.eq.s32.totalorder %s128, 0
      %s131 = sadd.s32 %s130, 1
      %s132 = scalar_select %p129, %s130, %s131
      %p135 = pneg %p129
      %p136 = scmp.eq.s32.totalorder %s14, 1
      %p137 = por %p135, %p136
      %p138 = scmp.ne.s32.totalorder %s130, %s133
      %p139 = scmp.eq.s32.totalorder %s14, 0
      %p140 = por %p138, %p139
      %p141 = scmp.ne.s32.totalorder %s130, %s133
      %p142 = scmp.eq.s32.totalorder %s19, 1
      %p143 = por %p141, %p142
      %p144 = scmp.ne.s32.totalorder %s133, %s134
      %p145 = scmp.eq.s32.totalorder %s19, 0
      %p146 = por %p144, %p145
      %p147 = scmp.ne.s32.totalorder %s133, %s134
      %p148 = scmp.eq.s32.totalorder %s20, 1
      %p149 = por %p147, %p148
      %p151 = scmp.ne.s32.totalorder %s134, %s150
      %p152 = scmp.eq.s32.totalorder %s20, 0
      %p153 = por %p151, %p152
      %s154 = ssub.s32 %s21, %s33
      %s155 = ssub.s32 %s22, %s29
      %s156 = sor.u32 %s154, %s155
      %p157 = scmp.eq.s32.totalorder %s156, 0
      %s159 = sadd.s32 %s158, 1
      %s160 = scalar_select %p157, %s158, %s159
      %p163 = pneg %p157
      %p164 = scmp.eq.s32.totalorder %s14, 1
      %p165 = por %p163, %p164
      %p166 = scmp.ne.s32.totalorder %s158, %s161
      %p167 = scmp.eq.s32.totalorder %s14, 0
      %p168 = por %p166, %p167
      %p169 = scmp.ne.s32.totalorder %s158, %s161
      %p170 = scmp.eq.s32.totalorder %s19, 1
      %p171 = por %p169, %p170
      %p172 = scmp.ne.s32.totalorder %s161, %s162
      %p173 = scmp.eq.s32.totalorder %s19, 0
      %p174 = por %p172, %p173
      %p175 = scmp.ne.s32.totalorder %s161, %s162
      %p176 = scmp.eq.s32.totalorder %s20, 1
      %p177 = por %p175, %p176
      %p179 = scmp.ne.s32.totalorder %s162, %s178
      %p180 = scmp.eq.s32.totalorder %s20, 0
      %p181 = por %p179, %p180
      %p182 = scmp.le.s32.totalorder 1, %s14
      %p183 = scmp.lt.s32.totalorder %s14, 3
      %p184 = pnand %p182, %p183
      %p185 = pneg %p184
      // Predicated region
      $region9: #{residual_connection.1} parent=5 // pred_check
        _
      $region10: #{residual_connection.1} parent=5 // pred_check_branch
        %187 = sbr.rel (%p184) target = $region12
      $region11: #{residual_connection.1} parent=5 // pred_region
        %s188 = ssub.s32 %s14, 1
        // Predicated region
        $region13: #{residual_connection.1} parent=11 // pred_check
          %p189 = pneg %p73
        $region14: #{residual_connection.1} parent=11 // pred_check_branch
          %191 = sbr.rel (%p189) target = $region16
        $region15: #{residual_connection.1} parent=11 // pred_region
          _
        $region16: #{residual_connection.1} parent=11 // pred_fallthru
          _
        // Predicated region
        $region17: #{residual_connection.1} parent=11 // pred_check
          %p192 = pneg %p94
        $region18: #{residual_connection.1} parent=11 // pred_check_branch
          %194 = sbr.rel (%p192) target = $region20
        $region19: #{residual_connection.1} parent=11 // pred_region
          _
        $region20: #{residual_connection.1} parent=11 // pred_fallthru
          _
        // Predicated region
        $region21: #{residual_connection.1} parent=11 // pred_check
          %p195 = pneg %p120
        $region22: #{residual_connection.1} parent=11 // pred_check_branch
          %197 = sbr.rel (%p195) target = $region24
        $region23: #{residual_connection.1} parent=11 // pred_region
          %p198 = scmp.lt.s32.totalorder %s24, 0
          %s199 = scalar_select %p198, %s24, 0
          %s200 = smul.addr %s199, 4
          %s201 = scalar_lea.vmem %s3, %s200
        $region24: #{residual_connection.1} parent=11 // pred_fallthru
          _
        // Predicated region
        $region25: #{residual_connection.1} parent=11 // pred_check
          %p202 = pneg %p146
        $region26: #{residual_connection.1} parent=11 // pred_check_branch
          %204 = sbr.rel (%p202) target = $region28
        $region27: #{residual_connection.1} parent=11 // pred_region
          %p205 = scmp.lt.s32.totalorder %s24, 0
          %s206 = scalar_select %p205, %s24, 0
          %s207 = scalar_lea.vmem %s4, %s206
        $region28: #{residual_connection.1} parent=11 // pred_fallthru
          _
      $region12: #{residual_connection.1} parent=5 // pred_fallthru
        _
      %p208 = scmp.lt.s32.totalorder %s14, 2
      // Predicated region
      $region29: #{residual_connection.1} parent=5 // pred_check
        %p209 = pneg %p208
      $region30: #{residual_connection.1} parent=5 // pred_check_branch
        %211 = sbr.rel (%p209) target = $region32
      $region31: #{residual_connection.1} parent=5 // pred_region
        // Predicated region
        $region33: #{residual_connection.1} parent=31 // pred_check
          %p212 = pneg %p46
        $region34: #{residual_connection.1} parent=31 // pred_check_branch
          %214 = sbr.rel (%p212) target = $region36
        $region35: #{residual_connection.1} parent=31 // pred_region
          %p215 = scmp.lt.s32.totalorder %s21, 1
          %s216 = scalar_select %p215, %s21, 1
          %s217 = smul.addr %s216, 8
          %s218 = scalar_lea.vmem %s0, %s217
        $region36: #{residual_connection.1} parent=31 // pred_fallthru
          _
      $region32: #{residual_connection.1} parent=5 // pred_fallthru
        _
      %p219 = scmp.le.s32.totalorder 1, %s14
      %p220 = scmp.lt.s32.totalorder %s14, 3
      %p221 = pnand %p219, %p220
      %p222 = pneg %p221
      // Predicated region
      $region37: #{residual_connection.1} parent=5 // pred_check
        _
      $region38: #{residual_connection.1} parent=5 // pred_check_branch
        %224 = sbr.rel (%p221) target = $region40
      $region39: #{residual_connection.1} parent=5 // pred_region
        %s225 = ssub.s32 %s14, 1
        %p226 = scmp.lt.s32.totalorder %s23, 1
        %s227 = scalar_select %p226, %s23, 1
        %s228 = smul.addr %s227, 8
        %s229 = scalar_lea.vmem %s0, %s228
        %p230 = pneg %p52
        %p231 = pneg %p49
        %p232 = pneg %p73
        %p233 = pneg %p70
        %p234 = pneg %p94
        %p235 = pneg %p91
        %p236 = scmp.lt.s32.totalorder %s24, 0
        %s237 = scalar_select %p236, %s24, 0
        %s238 = smul.addr %s237, 4
        %s239 = scalar_lea.vmem %s3, %s238
        %p240 = pneg %p120
        %p241 = pneg %p117
        %p242 = scmp.lt.s32.totalorder %s24, 0
        %s243 = scalar_select %p242, %s24, 0
        %s244 = scalar_lea.vmem %s4, %s243
        %p245 = pneg %p146
        %p246 = pneg %p143
        %p247 = pneg %p174
        %p248 = pneg %p171
        %s249 = sand.u32 %s161, 1
        %s250 = scalar_lea.sflag [#allocation4], %s249
        %s251 = sand.u32 %s161, 1
        %s252 = smul.addr %s251, 8
        %s253 = scalar_lea.vmem [#allocation3], %s252
        %p254 = scmp.lt.s32.totalorder %s23, 1
        %s255 = scalar_select %p254, %s23, 1
        %s256 = smul.addr %s255, 8
        %s257 = scalar_lea.vmem %s0, %s256
        %p258 = scmp.lt.s32.totalorder %s24, 0
        %s259 = scalar_select %p258, %s24, 0
        %s260 = smul.addr %s259, 4
        %s261 = scalar_lea.vmem %s3, %s260
        %p262 = scmp.lt.s32.totalorder %s24, 0
        %s263 = scalar_select %p262, %s24, 0
        %s264 = scalar_lea.vmem %s4, %s263
        %p266 = scmp.eq.s32.totalorder %s24, 0
        // Predicated region
        $region41: #{residual_connection.1} parent=39 // pred_check
          %p267 = pneg %p266
        $region42: #{residual_connection.1} parent=39 // pred_check_branch
          %269 = sbr.rel (%p267) target = $region44
        $region43: #{residual_connection.1} parent=39 // pred_region
          %v270 = vld [vmem:[%s257] sm:$0xff]
          %271 = vadd.xlane.f32.xlu0 %v270
          %v272 = vpop.xlane.xlu0 %271
          %v273 = vrcp.pop 128.0
          %v274 = vmul.f32 %v272, %v273
          %v275 = vsub.f32 %v270, %v274
          %v276 = vmul.f32 %v275, %v275
          %277 = vadd.xlane.f32.xlu0 %v276
          %v278 = vpop.xlane.xlu0 %277
          %v279 = vmul.f32 %v278, %v273
          %v280 = vadd.f32 %v279, 1e-05
          %v281 = vrsqrt.pop %v280
          %v282 = vmul.f32 %v275, %v281
          %v283 = vld [vmem:[%s1] sm:$0x1]
          %v285 = vlaneseq
          %v286 = vshrl.u32 %v285, 7
          %v287 = vsub.s32 0, %v286
          %v288 = vrot.slane %v283, %v287
          %v290 = vmul.f32 %v282, %v288
          %v291 = vld [vmem:[%s2] sm:$0x1]
          %v293 = vlaneseq
          %v294 = vshrl.u32 %v293, 7
          %v295 = vsub.s32 0, %v294
          %v296 = vrot.slane %v291, %v295
          %v298 = vadd.f32 %v290, %v296
          %v299 = vpack.c.bf16 %v298, %v298
          %300 = vst [vmem:[#allocation2] sm:$0xf] %v299
        $region44: #{residual_connection.1} parent=39 // pred_fallthru
          _
        %v301 = vld [vmem:[#allocation2] sm:$0xf]
        %v302 = vld [vmem:[%s261] sm:$0xf]
        %v303 = vld [vmem:[%s261 + $0x4] sm:$0xf]
        %v304 = vld [vmem:[%s261 + $0x8] sm:$0xf]
        %v305 = vld [vmem:[%s261 + $0xc] sm:$0xf]
        %v306 = vld [vmem:[%s261 + $0x10] sm:$0xf]
        %v307 = vld [vmem:[%s261 + $0x14] sm:$0xf]
        %v308 = vld [vmem:[%s261 + $0x18] sm:$0xf]
        %v309 = vld [vmem:[%s261 + $0x1c] sm:$0xf]
        %v310 = vld [vmem:[%s261 + $0x20] sm:$0xf]
        %v311 = vld [vmem:[%s261 + $0x24] sm:$0xf]
        %v312 = vld [vmem:[%s261 + $0x28] sm:$0xf]
        %v313 = vld [vmem:[%s261 + $0x2c] sm:$0xf]
        %v314 = vld [vmem:[%s261 + $0x30] sm:$0xf]
        %v315 = vld [vmem:[%s261 + $0x34] sm:$0xf]
        %v316 = vld [vmem:[%s261 + $0x38] sm:$0xf]
        %v317 = vld [vmem:[%s261 + $0x3c] sm:$0xf]
        %v318 = vld [vmem:[%s264] sm:$0x1]
        %v320 = vlaneseq
        %v321 = vshrl.u32 %v320, 7
        %v322 = vsub.s32 0, %v321
        %v323 = vrot.slane %v318, %v322
        %v341 = vunpack.c.l.b16 %v302
        %v342 = vunpack.c.l.b16 %v303
        %v343 = vunpack.c.l.b16 %v304
        %v344 = vunpack.c.l.b16 %v305
        %v345 = vunpack.c.l.b16 %v306
        %v346 = vunpack.c.l.b16 %v307
        %v347 = vunpack.c.l.b16 %v308
        %v348 = vunpack.c.l.b16 %v309
        %v349 = vunpack.c.l.b16 %v310
        %v350 = vunpack.c.l.b16 %v311
        %v351 = vunpack.c.l.b16 %v312
        %v352 = vunpack.c.l.b16 %v313
        %v353 = vunpack.c.l.b16 %v314
        %v354 = vunpack.c.l.b16 %v315
        %v355 = vunpack.c.l.b16 %v316
        %v356 = vunpack.c.l.b16 %v317
        %v357 = vpack.c.b16 %v342, %v341
        %v358 = vpack.c.b16 %v344, %v343
        %v359 = vpack.c.b16 %v346, %v345
        %v360 = vpack.c.b16 %v348, %v347
        %v361 = vpack.c.b16 %v350, %v349
        %v362 = vpack.c.b16 %v352, %v351
        %v363 = vpack.c.b16 %v354, %v353
        %v364 = vpack.c.b16 %v356, %v355
        %373 = vmatprep.subr.bf16.mxu0 0
        %374 = vmatpush1.bf16.msra.mxu0 %v357
        %375 = vmatprep.subr.bf16.mxu0 0
        %376 = vmatpush1.bf16.msra.mxu0 %v358
        %377 = vmatprep.subr.bf16.mxu0 0
        %378 = vmatpush1.bf16.msra.mxu0 %v359
        %379 = vmatprep.subr.bf16.mxu0 0
        %380 = vmatpush1.bf16.msra.mxu0 %v360
        %381 = vmatprep.subr.bf16.mxu0 0
        %382 = vmatpush1.bf16.msra.mxu0 %v361
        %383 = vmatprep.subr.bf16.mxu0 0
        %384 = vmatpush1.bf16.msra.mxu0 %v362
        %385 = vmatprep.subr.bf16.mxu0 0
        %386 = vmatpush1.bf16.msra.mxu0 %v363
        %387 = vmatprep.subr.bf16.mxu0 0
        %388 = vmatpush1.bf16.msra.mxu0 %v364
        %389 = vmatprep.subr.bf16.mxu0 0
        %390 = vmatpush1.bf16.msra.mxu0 0
        %391 = vmatprep.subr.bf16.mxu0 0
        %392 = vmatpush1.bf16.msra.mxu0 0
        %393 = vmatprep.subr.bf16.mxu0 0
        %394 = vmatpush1.bf16.msra.mxu0 0
        %395 = vmatprep.subr.bf16.mxu0 0
        %396 = vmatpush1.bf16.msra.mxu0 0
        %397 = vmatprep.subr.bf16.mxu0 0
        %398 = vmatpush1.bf16.msra.mxu0 0
        %399 = vmatprep.subr.bf16.mxu0 0
        %400 = vmatpush1.bf16.msra.mxu0 0
        %401 = vmatprep.subr.bf16.mxu0 0
        %402 = vmatpush1.bf16.msra.mxu0 0
        %403 = vmatprep.subr.bf16.mxu0 0
        %404 = vmatpush1.bf16.msra.mxu0 0
        %405 = vmatprep.mubr.bf16.mxu0 0
        %406 = vmatmul.mubr.bf16.gmra.mrb[0].mxu0 %v301
        %v407 = vpop.f32.mrb[0].mxu0
        %v408 = vadd.f32 %v323, %v407
        %v409 = vpop.f32.mrb[0].mxu0
        %v410 = vpop.f32.mrb[0].mxu0
        %v411 = vpop.f32.mrb[0].mxu0
        %412 = vdwg.mxu0
        %s413 = smul.u32 %s24, 128
        %s414 = sshra.s32 %s413, 7
        %s415 = sand.u32 %s413, 127
        %s416 = scalar_lea.vmem %s257, %s414
        %v417 = vld [vmem:[%s416] sm:$0xff]
        %v418 = vadd.f32 %v417, %v408
        %419 = vst [vmem:[%s253] sm:$0xff] %v418
        %s420 = sand.u32 %s161, 1
        %s421 = scalar_lea.sflag [#allocation4], %s420
        %s422 = sand.u32 %s161, 1
        %s423 = smul.addr %s422, 8
        %s424 = scalar_lea.vmem [#allocation3], %s423
        // Predicated region
        $region45: #{residual_connection.1} parent=39 // pred_check
          %p425 = pneg %p171
        $region46: #{residual_connection.1} parent=39 // pred_check_branch
          %427 = sbr.rel (%p425) target = $region48
        $region47: #{residual_connection.1} parent=39 // pred_region
          %s429 = ssub.s32 128, 128
          %430 = vsyncadd %s421, %s429
          %s431 = sadd.s32 %s24, %s23
          %s432 = smul.addr %s431, 128
          %s433 = scalar_lea.hbm %s5, %s432
          %s435 = sshll.u32 %s424, 4
          %s436 = int_to_ptr.vmem [resolvable:$true] %s435
          %438 = dma.vmem_to_hbm [thread:$0]  %s436, 128, %s433, %s421
        $region48: #{residual_connection.1} parent=39 // pred_fallthru
          _
      $region40: #{residual_connection.1} parent=5 // pred_fallthru
        _
      %p439 = scmp.le.s32.totalorder 2, %s14
      // Predicated region
      $region49: #{residual_connection.1} parent=5 // pred_check
        %p440 = pneg %p439
      $region50: #{residual_connection.1} parent=5 // pred_check_branch
        %442 = sbr.rel (%p440) target = $region52
      $region51: #{residual_connection.1} parent=5 // pred_region
        %s443 = ssub.s32 %s14, 2
        // Predicated region
        $region53: #{residual_connection.1} parent=51 // pred_check
          %p444 = pneg %p177
        $region54: #{residual_connection.1} parent=51 // pred_check_branch
          %446 = sbr.rel (%p444) target = $region56
        $region55: #{residual_connection.1} parent=51 // pred_region
          %s447 = sand.u32 %s162, 1
          %s448 = scalar_lea.sflag [#allocation4], %s447
          %s449 = sand.u32 %s162, 1
          %s450 = smul.addr %s449, 8
          %s451 = scalar_lea.vmem [#allocation3], %s450
          %452 = dma.done %s448, 128
        $region56: #{residual_connection.1} parent=51 // pred_fallthru
          _
      $region52: #{residual_connection.1} parent=5 // pred_fallthru
        _
    $region6: #{residual_connection.1} parent=1 // loop_footer
      %s18 = sadd.s32 1, %s14
    $region7: #{residual_connection.1} parent=1 // loop_footer_branch
      %13 = sbr.rel target = $region3
    $region8: #{residual_connection.1} parent=1 // loop_exit
      _
    %453 = vsyncpa [#allocation4], 1
    %s454 = scalar_lea.sflag [#allocation4], 1
    %455 = vsyncpa %s454, 1

</llo_original>
